<compile_context>
chip_gen: v5e
topology: v5e:2x2
jax: 0.10.0
libtpu: 0.0.40
codegen_flags: <defaults>
</compile_context>

<pallas_src>
import functools

import jax
import jax.numpy as jnp
from jax.experimental import pallas as pl
from jax.experimental.pallas import tpu as pltpu


def _round_up(x, m):
    return ((x + m - 1) // m) * m


def _pick_row_tile(ho, wo):
    """Smallest row tile TH dividing Ho with TH*Wo sublane-aligned and >=128."""
    for th in range(1, ho + 1):
        if ho % th:
            continue
        if (th * wo) % 8 == 0 and th * wo >= 128:
            return th
    return ho  # fall back to full image (block == array dim is always legal)


def _depthwise_block_kernel(xp_ref, wdw_ref, bdw_ref, wsep_ref, bsep_ref,
                            out_ref, *, stride, th, wo, cp):
    """One (batch, row-tile) grid step.

    xp_ref  : (Hp, Wp, Cp)   f32  zero-padded NHWC image (channel lane-padded)
    wdw_ref : (9, Cp)        f32  depthwise 3x3 taps, BN(dw) scale folded in
    bdw_ref : (1, Cp)        f32  folded BN(dw) bias
    wsep_ref: (Cp, Cop)      bf16 1x1 weights, BN(sep) scale folded in
    bsep_ref: (1, Cop)       f32  folded BN(sep) bias
    out_ref : (TH*Wo, Cop)   f32  flattened, lane-dense output tile
    """
    j = pl.program_id(1)
    row0 = pl.multiple_of(j * (th * stride), th * stride)

    wdw = wdw_ref[...]                                     # (9, Cp)

    # Depthwise 3x3: 9 per-tap ref-view loads, no whole-image materialization.
    acc = jnp.zeros((th, wo, cp), dtype=jnp.float32)
    for ky in range(3):
        for kx in range(3):
            if stride == 1:
                rows = pl.ds(row0 + ky, th)
                cols = pl.ds(kx, wo)
            else:
                rows = pl.ds(row0 + ky, th, stride)
                cols = pl.ds(kx, wo, stride)
            patch = xp_ref[rows, cols, :]                  # (TH, Wo, Cp)
            w_tap = wdw[ky * 3 + kx].reshape(1, 1, cp)     # (1, 1, Cp)
            acc = acc + patch * w_tap

    # BN(dw) bias (scale already folded into the taps) + ReLU.
    dw = jnp.maximum(acc + bdw_ref[...].reshape(1, 1, cp), 0.0)

    # Pointwise 1x1 conv on the MXU: bf16 operands, f32 accumulation.
    flat = dw.reshape(th * wo, cp).astype(jnp.bfloat16)    # (M, K), K = Cp (128x)
    sep = jnp.dot(flat, wsep_ref[...],
                  preferred_element_type=jnp.float32)      # (M, Cop) f32

    # BN(sep) bias + ReLU; Cop is a multiple of 128 -> unmasked lane-dense store.
    out_ref[...] = jnp.maximum(sep + bsep_ref[...], 0.0)


def depthwise_block_forward(x_nchw, params, *, stride=1, eps=1e-5):
    """Forward pass of DepthWiseBlock. x_nchw: (N, Cin, H, W) float32."""
    n, cin, h, w = x_nchw.shape
    cout = params["w_sep"].shape[0]
    ho = (h + 2 - 3) // stride + 1
    wo = (w + 2 - 3) // stride + 1
    hp, wp = h + 2, w + 2

    cp = _round_up(cin, 128)       # lane-pad input channels
    cop = _round_up(cout, 128)     # lane-pad output channels
    th = _pick_row_tile(ho, wo)    # output row tile

    # ---- layout / BN-folding glue (plain JAX, once per call) ----
    # TODO(synk): fuse NCHW<->NHWC transposes + the 1-px spatial pad into the
    # kernel (in-kernel halo masking) when the surrounding graph can stay NHWC.
    x = jnp.transpose(x_nchw, (0, 2, 3, 1))                       # NCHW -> NHWC
    xp = jnp.pad(x, ((0, 0), (1, 1), (1, 1), (0, cp - cin)))      # halo + lane pad

    s_dw = params["bn_dw_gamma"] / jnp.sqrt(params["bn_dw_var"] + eps)
    b_dw = params["bn_dw_beta"] - params["bn_dw_mean"] * s_dw
    s_sep = params["bn_sep_gamma"] / jnp.sqrt(params["bn_sep_var"] + eps)
    b_sep = params["bn_sep_beta"] - params["bn_sep_mean"] * s_sep

    # depthwise 3x3: torch (Cin,1,3,3) -> tap-major (9,Cin); fold BN(dw) scale.
    w_dw = jnp.transpose(params["w_dw"][:, 0, :, :], (1, 2, 0)).reshape(9, cin)
    w_dw = (w_dw * s_dw[None, :]).astype(jnp.float32)
    w_dw = jnp.pad(w_dw, ((0, 0), (0, cp - cin)))
    b_dw_p = jnp.pad(b_dw, (0, cp - cin)).reshape(1, cp).astype(jnp.float32)

    # pointwise 1x1: torch (Cout,Cin,1,1) -> (Cin,Cout); fold BN(sep) scale; bf16.
    w_sep = jnp.transpose(params["w_sep"][:, :, 0, 0], (1, 0)) * s_sep[None, :]
    w_sep = jnp.pad(w_sep, ((0, cp - cin), (0, cop - cout))).astype(jnp.bfloat16)
    b_sep_p = jnp.pad(b_sep, (0, cop - cout)).reshape(1, cop).astype(jnp.float32)

    kernel = functools.partial(_depthwise_block_kernel,
                               stride=stride, th=th, wo=wo, cp=cp)

    out_flat = pl.pallas_call(
        kernel,
        out_shape=jax.ShapeDtypeStruct((n, ho * wo, cop), jnp.float32),
        grid_spec=pltpu.PrefetchScalarGridSpec(
            num_scalar_prefetch=0,
            grid=(n, ho // th),
            in_specs=[
                # Whole padded image stays resident across the row-tile axis
                # (block index is constant in j -> DMA'd once per batch).
                pl.BlockSpec((None, hp, wp, cp), lambda b, j: (b, 0, 0, 0)),
                pl.BlockSpec((9, cp), lambda b, j: (0, 0)),
                pl.BlockSpec((1, cp), lambda b, j: (0, 0)),
                pl.BlockSpec((cp, cop), lambda b, j: (0, 0)),
                pl.BlockSpec((1, cop), lambda b, j: (0, 0)),
            ],
            out_specs=pl.BlockSpec((None, th * wo, cop), lambda b, j: (b, j, 0)),
        ),
        compiler_params=pltpu.CompilerParams(
            dimension_semantics=("parallel", "parallel"),
            vmem_limit_bytes=32 * 1024 * 1024),
    )(xp, w_dw, b_dw_p, w_sep, b_sep_p)

    out = out_flat.reshape(n, ho, wo, cop)[..., :cout]            # drop lane pad
    return jnp.transpose(out, (0, 3, 1, 2))                       # NHWC -> NCHW


def _reference_forward(x_nchw, params, *, stride=1, eps=1e-5):
    """Pure-JAX reference (mirrors the PyTorch forward) for verification."""
    dn = jax.lax.conv_dimension_numbers(x_nchw.shape, params["w_dw"].shape,
                                        ("NCHW", "OIHW", "NCHW"))
    cin = x_nchw.shape[1]
    out = jax.lax.conv_general_dilated(
        x_nchw, params["w_dw"], window_strides=(stride, stride),
        padding=((1, 1), (1, 1)), dimension_numbers=dn,
        feature_group_count=cin)
    s_dw = params["bn_dw_gamma"] / jnp.sqrt(params["bn_dw_var"] + eps)
    b_dw = params["bn_dw_beta"] - params["bn_dw_mean"] * s_dw
    out = out * s_dw[None, :, None, None] + b_dw[None, :, None, None]
    out = jnp.maximum(out, 0.0)
    dn2 = jax.lax.conv_dimension_numbers(out.shape, params["w_sep"].shape,
                                         ("NCHW", "OIHW", "NCHW"))
    out = jax.lax.conv_general_dilated(
        out, params["w_sep"], window_strides=(1, 1), padding="VALID",
        dimension_numbers=dn2)
    s_sep = params["bn_sep_gamma"] / jnp.sqrt(params["bn_sep_var"] + eps)
    b_sep = params["bn_sep_beta"] - params["bn_sep_mean"] * s_sep
    out = out * s_sep[None, :, None, None] + b_sep[None, :, None, None]
    out = jnp.maximum(out, 0.0)
    return out


def make_params(key, inplanes, planes):
    ks = jax.random.split(key, 8)
    return {
        # conv_dw: (inplanes, 1, 3, 3), groups=inplanes, no bias
        "w_dw": 0.1 * jax.random.normal(ks[0], (inplanes, 1, 3, 3), jnp.float32),
        "bn_dw_gamma": 1.0 + 0.1 * jax.random.normal(ks[1], (inplanes,), jnp.float32),
        "bn_dw_beta": 0.1 * jax.random.normal(ks[2], (inplanes,), jnp.float32),
        "bn_dw_mean": 0.05 * jax.random.normal(ks[3], (inplanes,), jnp.float32),
        "bn_dw_var": jnp.abs(jax.random.normal(ks[4], (inplanes,), jnp.float32)) + 0.5,
        # conv_sep: (planes, inplanes, 1, 1), no bias
        "w_sep": 0.1 * jax.random.normal(ks[5], (planes, inplanes, 1, 1), jnp.float32),
        "bn_sep_gamma": 1.0 + 0.1 * jax.random.normal(ks[6], (planes,), jnp.float32),
        "bn_sep_beta": 0.1 * jax.random.normal(ks[7], (planes,), jnp.float32),
        "bn_sep_mean": jnp.zeros((planes,), jnp.float32),
        "bn_sep_var": jnp.ones((planes,), jnp.float32),
    }
    # TODO(synk): PReLU variant (prelu=True) not instantiated; default ReLU path implemented.


if __name__ == "__main__":
    key = jax.random.PRNGKey(0)
    k_x, k_p = jax.random.split(key)

    N, CIN, COUT, H, W, STRIDE = 2, 4, 8, 16, 16, 1
    x = jax.random.normal(k_x, (N, CIN, H, W), jnp.float32)
    params = make_params(k_p, CIN, COUT)

    out = depthwise_block_forward(x, params, stride=STRIDE)
    out = jax.block_until_ready(out)

    ref = jax.block_until_ready(_reference_forward(x, params, stride=STRIDE))
    assert out.shape == ref.shape
    # bf16 MXU operands for the 1x1 conv slightly loosen the tolerance.
    assert jnp.allclose(out, ref, atol=2e-2, rtol=2e-2), (
        float(jnp.max(jnp.abs(out - ref))))

    print("KERNEL_OK")
</pallas_src>

<mosaic_0001>
module attributes {stable_mosaic.version = 11 : i64} {
  func.func @_depthwise_block_kernel(%arg0: i32, %arg1: i32, %arg2: memref<1x18x18x128xf32, #tpu.memory_space<vmem>>, %arg3: memref<9x128xf32, #tpu.memory_space<vmem>>, %arg4: memref<1x128xf32, #tpu.memory_space<vmem>>, %arg5: memref<128x128xbf16, #tpu.memory_space<vmem>>, %arg6: memref<1x128xf32, #tpu.memory_space<vmem>>, %arg7: memref<1x128x128xf32, #tpu.memory_space<vmem>>) attributes {dimension_semantics = [#tpu.dimension_semantics<parallel>, #tpu.dimension_semantics<parallel>], iteration_bounds = array<i64: 2, 2>, scalar_prefetch = 0 : i64, scratch_operands = 0 : i64, tpu.core_type = #tpu.core_type<tc>, window_params = [{transform_indices = @transform_0, window_bounds = array<i64: 1, 18, 18, 128>}, {pipeline_mode = #tpu.pipeline_mode<synchronous>, transform_indices = @transform_1, window_bounds = array<i64: 9, 128>}, {pipeline_mode = #tpu.pipeline_mode<synchronous>, transform_indices = @transform_2, window_bounds = array<i64: 1, 128>}, {pipeline_mode = #tpu.pipeline_mode<synchronous>, transform_indices = @transform_3, window_bounds = array<i64: 128, 128>}, {pipeline_mode = #tpu.pipeline_mode<synchronous>, transform_indices = @transform_4, window_bounds = array<i64: 1, 128>}, {transform_indices = @transform_5, window_bounds = array<i64: 1, 128, 128>}]} {
    %c8_i32 = arith.constant 8 : i32
    %0 = arith.muli %arg1, %c8_i32 : i32
    %1 = tpu.assume_multiple %0, 8 : i32
    %c0 = arith.constant 0 : index
    %c0_0 = arith.constant 0 : index
    %2 = vector.load %arg3[%c0, %c0_0] : memref<9x128xf32, #tpu.memory_space<vmem>>, vector<9x128xf32>
    %cst = arith.constant 0.000000e+00 : f32
    %3 = vector.broadcast %cst : f32 to vector<8x16x128xf32>
    %c0_i32 = arith.constant 0 : i32
    %4 = arith.addi %1, %c0_i32 : i32
    %c0_1 = arith.constant 0 : index
    %5 = arith.index_cast %4 : i32 to index
    %c0_2 = arith.constant 0 : index
    %c0_3 = arith.constant 0 : index
    %6 = vector.load %arg2[%c0_1, %5, %c0_2, %c0_3] : memref<1x18x18x128xf32, #tpu.memory_space<vmem>>, vector<1x8x16x128xf32>
    %7 = vector.shape_cast %6 : vector<1x8x16x128xf32> to vector<8x16x128xf32>
    %8 = vector.extract_strided_slice %2 {offsets = [0, 0], sizes = [1, 128], strides = [1, 1]} : vector<9x128xf32> to vector<1x128xf32>
    %9 = vector.shape_cast %8 : vector<1x128xf32> to vector<128xf32>
    %10 = vector.shape_cast %9 : vector<128xf32> to vector<1x1x128xf32>
    %11 = vector.broadcast %10 : vector<1x1x128xf32> to vector<8x16x128xf32>
    %12 = arith.mulf %7, %11 : vector<8x16x128xf32>
    %13 = arith.addf %3, %12 : vector<8x16x128xf32>
    %c0_i32_4 = arith.constant 0 : i32
    %14 = arith.addi %1, %c0_i32_4 : i32
    %c0_5 = arith.constant 0 : index
    %15 = arith.index_cast %14 : i32 to index
    %c1 = arith.constant 1 : index
    %c0_6 = arith.constant 0 : index
    %16 = vector.load %arg2[%c0_5, %15, %c1, %c0_6] : memref<1x18x18x128xf32, #tpu.memory_space<vmem>>, vector<1x8x16x128xf32>
    %17 = vector.shape_cast %16 : vector<1x8x16x128xf32> to vector<8x16x128xf32>
    %18 = vector.extract_strided_slice %2 {offsets = [1, 0], sizes = [1, 128], strides = [1, 1]} : vector<9x128xf32> to vector<1x128xf32>
    %19 = vector.shape_cast %18 : vector<1x128xf32> to vector<128xf32>
    %20 = vector.shape_cast %19 : vector<128xf32> to vector<1x1x128xf32>
    %21 = vector.broadcast %20 : vector<1x1x128xf32> to vector<8x16x128xf32>
    %22 = arith.mulf %17, %21 : vector<8x16x128xf32>
    %23 = arith.addf %13, %22 : vector<8x16x128xf32>
    %c0_i32_7 = arith.constant 0 : i32
    %24 = arith.addi %1, %c0_i32_7 : i32
    %c0_8 = arith.constant 0 : index
    %25 = arith.index_cast %24 : i32 to index
    %c2 = arith.constant 2 : index
    %c0_9 = arith.constant 0 : index
    %26 = vector.load %arg2[%c0_8, %25, %c2, %c0_9] : memref<1x18x18x128xf32, #tpu.memory_space<vmem>>, vector<1x8x16x128xf32>
    %27 = vector.shape_cast %26 : vector<1x8x16x128xf32> to vector<8x16x128xf32>
    %28 = vector.extract_strided_slice %2 {offsets = [2, 0], sizes = [1, 128], strides = [1, 1]} : vector<9x128xf32> to vector<1x128xf32>
    %29 = vector.shape_cast %28 : vector<1x128xf32> to vector<128xf32>
    %30 = vector.shape_cast %29 : vector<128xf32> to vector<1x1x128xf32>
    %31 = vector.broadcast %30 : vector<1x1x128xf32> to vector<8x16x128xf32>
    %32 = arith.mulf %27, %31 : vector<8x16x128xf32>
    %33 = arith.addf %23, %32 : vector<8x16x128xf32>
    %c1_i32 = arith.constant 1 : i32
    %34 = arith.addi %1, %c1_i32 : i32
    %c0_10 = arith.constant 0 : index
    %35 = arith.index_cast %34 : i32 to index
    %c0_11 = arith.constant 0 : index
    %c0_12 = arith.constant 0 : index
    %36 = vector.load %arg2[%c0_10, %35, %c0_11, %c0_12] : memref<1x18x18x128xf32, #tpu.memory_space<vmem>>, vector<1x8x16x128xf32>
    %37 = vector.shape_cast %36 : vector<1x8x16x128xf32> to vector<8x16x128xf32>
    %38 = vector.extract_strided_slice %2 {offsets = [3, 0], sizes = [1, 128], strides = [1, 1]} : vector<9x128xf32> to vector<1x128xf32>
    %39 = vector.shape_cast %38 : vector<1x128xf32> to vector<128xf32>
    %40 = vector.shape_cast %39 : vector<128xf32> to vector<1x1x128xf32>
    %41 = vector.broadcast %40 : vector<1x1x128xf32> to vector<8x16x128xf32>
    %42 = arith.mulf %37, %41 : vector<8x16x128xf32>
    %43 = arith.addf %33, %42 : vector<8x16x128xf32>
    %c1_i32_13 = arith.constant 1 : i32
    %44 = arith.addi %1, %c1_i32_13 : i32
    %c0_14 = arith.constant 0 : index
    %45 = arith.index_cast %44 : i32 to index
    %c1_15 = arith.constant 1 : index
    %c0_16 = arith.constant 0 : index
    %46 = vector.load %arg2[%c0_14, %45, %c1_15, %c0_16] : memref<1x18x18x128xf32, #tpu.memory_space<vmem>>, vector<1x8x16x128xf32>
    %47 = vector.shape_cast %46 : vector<1x8x16x128xf32> to vector<8x16x128xf32>
    %48 = vector.extract_strided_slice %2 {offsets = [4, 0], sizes = [1, 128], strides = [1, 1]} : vector<9x128xf32> to vector<1x128xf32>
    %49 = vector.shape_cast %48 : vector<1x128xf32> to vector<128xf32>
    %50 = vector.shape_cast %49 : vector<128xf32> to vector<1x1x128xf32>
    %51 = vector.broadcast %50 : vector<1x1x128xf32> to vector<8x16x128xf32>
    %52 = arith.mulf %47, %51 : vector<8x16x128xf32>
    %53 = arith.addf %43, %52 : vector<8x16x128xf32>
    %c1_i32_17 = arith.constant 1 : i32
    %54 = arith.addi %1, %c1_i32_17 : i32
    %c0_18 = arith.constant 0 : index
    %55 = arith.index_cast %54 : i32 to index
    %c2_19 = arith.constant 2 : index
    %c0_20 = arith.constant 0 : index
    %56 = vector.load %arg2[%c0_18, %55, %c2_19, %c0_20] : memref<1x18x18x128xf32, #tpu.memory_space<vmem>>, vector<1x8x16x128xf32>
    %57 = vector.shape_cast %56 : vector<1x8x16x128xf32> to vector<8x16x128xf32>
    %58 = vector.extract_strided_slice %2 {offsets = [5, 0], sizes = [1, 128], strides = [1, 1]} : vector<9x128xf32> to vector<1x128xf32>
    %59 = vector.shape_cast %58 : vector<1x128xf32> to vector<128xf32>
    %60 = vector.shape_cast %59 : vector<128xf32> to vector<1x1x128xf32>
    %61 = vector.broadcast %60 : vector<1x1x128xf32> to vector<8x16x128xf32>
    %62 = arith.mulf %57, %61 : vector<8x16x128xf32>
    %63 = arith.addf %53, %62 : vector<8x16x128xf32>
    %c2_i32 = arith.constant 2 : i32
    %64 = arith.addi %1, %c2_i32 : i32
    %c0_21 = arith.constant 0 : index
    %65 = arith.index_cast %64 : i32 to index
    %c0_22 = arith.constant 0 : index
    %c0_23 = arith.constant 0 : index
    %66 = vector.load %arg2[%c0_21, %65, %c0_22, %c0_23] : memref<1x18x18x128xf32, #tpu.memory_space<vmem>>, vector<1x8x16x128xf32>
    %67 = vector.shape_cast %66 : vector<1x8x16x128xf32> to vector<8x16x128xf32>
    %68 = vector.extract_strided_slice %2 {offsets = [6, 0], sizes = [1, 128], strides = [1, 1]} : vector<9x128xf32> to vector<1x128xf32>
    %69 = vector.shape_cast %68 : vector<1x128xf32> to vector<128xf32>
    %70 = vector.shape_cast %69 : vector<128xf32> to vector<1x1x128xf32>
    %71 = vector.broadcast %70 : vector<1x1x128xf32> to vector<8x16x128xf32>
    %72 = arith.mulf %67, %71 : vector<8x16x128xf32>
    %73 = arith.addf %63, %72 : vector<8x16x128xf32>
    %c2_i32_24 = arith.constant 2 : i32
    %74 = arith.addi %1, %c2_i32_24 : i32
    %c0_25 = arith.constant 0 : index
    %75 = arith.index_cast %74 : i32 to index
    %c1_26 = arith.constant 1 : index
    %c0_27 = arith.constant 0 : index
    %76 = vector.load %arg2[%c0_25, %75, %c1_26, %c0_27] : memref<1x18x18x128xf32, #tpu.memory_space<vmem>>, vector<1x8x16x128xf32>
    %77 = vector.shape_cast %76 : vector<1x8x16x128xf32> to vector<8x16x128xf32>
    %78 = vector.extract_strided_slice %2 {offsets = [7, 0], sizes = [1, 128], strides = [1, 1]} : vector<9x128xf32> to vector<1x128xf32>
    %79 = vector.shape_cast %78 : vector<1x128xf32> to vector<128xf32>
    %80 = vector.shape_cast %79 : vector<128xf32> to vector<1x1x128xf32>
    %81 = vector.broadcast %80 : vector<1x1x128xf32> to vector<8x16x128xf32>
    %82 = arith.mulf %77, %81 : vector<8x16x128xf32>
    %83 = arith.addf %73, %82 : vector<8x16x128xf32>
    %c2_i32_28 = arith.constant 2 : i32
    %84 = arith.addi %1, %c2_i32_28 : i32
    %c0_29 = arith.constant 0 : index
    %85 = arith.index_cast %84 : i32 to index
    %c2_30 = arith.constant 2 : index
    %c0_31 = arith.constant 0 : index
    %86 = vector.load %arg2[%c0_29, %85, %c2_30, %c0_31] : memref<1x18x18x128xf32, #tpu.memory_space<vmem>>, vector<1x8x16x128xf32>
    %87 = vector.shape_cast %86 : vector<1x8x16x128xf32> to vector<8x16x128xf32>
    %88 = vector.extract_strided_slice %2 {offsets = [8, 0], sizes = [1, 128], strides = [1, 1]} : vector<9x128xf32> to vector<1x128xf32>
    %89 = vector.shape_cast %88 : vector<1x128xf32> to vector<128xf32>
    %90 = vector.shape_cast %89 : vector<128xf32> to vector<1x1x128xf32>
    %91 = vector.broadcast %90 : vector<1x1x128xf32> to vector<8x16x128xf32>
    %92 = arith.mulf %87, %91 : vector<8x16x128xf32>
    %93 = arith.addf %83, %92 : vector<8x16x128xf32>
    %c0_32 = arith.constant 0 : index
    %c0_33 = arith.constant 0 : index
    %94 = vector.load %arg4[%c0_32, %c0_33] : memref<1x128xf32, #tpu.memory_space<vmem>>, vector<1x128xf32>
    %95 = vector.shape_cast %94 : vector<1x128xf32> to vector<1x1x128xf32>
    %96 = vector.broadcast %95 : vector<1x1x128xf32> to vector<8x16x128xf32>
    %97 = arith.addf %93, %96 : vector<8x16x128xf32>
    %cst_34 = arith.constant 0.000000e+00 : f32
    %98 = vector.broadcast %cst_34 : f32 to vector<8x16x128xf32>
    %99 = arith.maximumf %97, %98 : vector<8x16x128xf32>
    %100 = vector.shape_cast %99 : vector<8x16x128xf32> to vector<128x128xf32>
    %101 = arith.truncf %100 : vector<128x128xf32> to vector<128x128xbf16>
    %c0_35 = arith.constant 0 : index
    %c0_36 = arith.constant 0 : index
    %102 = vector.load %arg5[%c0_35, %c0_36] : memref<128x128xbf16, #tpu.memory_space<vmem>>, vector<128x128xbf16>
    %cst_37 = arith.constant dense<0.000000e+00> : vector<128x128xf32>
    %103 = tpu.matmul %101, %102, %cst_37 {dimension_numbers = #tpu.dot_dimension_numbers<[1], [0], [0], [1], [0, 0, 1, 1], [], []>} : vector<128x128xbf16>, vector<128x128xbf16>, vector<128x128xf32> -> vector<128x128xf32>
    %c0_38 = arith.constant 0 : index
    %c0_39 = arith.constant 0 : index
    %104 = vector.load %arg6[%c0_38, %c0_39] : memref<1x128xf32, #tpu.memory_space<vmem>>, vector<1x128xf32>
    %105 = vector.broadcast %104 : vector<1x128xf32> to vector<128x128xf32>
    %106 = arith.addf %103, %105 : vector<128x128xf32>
    %cst_40 = arith.constant 0.000000e+00 : f32
    %107 = vector.broadcast %cst_40 : f32 to vector<128x128xf32>
    %108 = arith.maximumf %106, %107 : vector<128x128xf32>
    %c0_41 = arith.constant 0 : index
    %c0_42 = arith.constant 0 : index
    %c0_43 = arith.constant 0 : index
    %109 = vector.load %arg7[%c0_41, %c0_42, %c0_43] : memref<1x128x128xf32, #tpu.memory_space<vmem>>, vector<1x128x128xf32>
    %110 = vector.shape_cast %109 : vector<1x128x128xf32> to vector<128x128xf32>
    %111 = vector.shape_cast %108 : vector<128x128xf32> to vector<1x128x128xf32>
    tpu.vector_store %arg7[%c0_41, %c0_42, %c0_43], %111 {strides = array<i32>} : memref<1x128x128xf32, #tpu.memory_space<vmem>>, vector<1x128x128xf32>,
    return
  }
  func.func @transform_0(%arg0: i32, %arg1: i32) -> (i32, i32, i32, i32) {
    %c0_i32 = arith.constant 0 : i32
    %c0_i32_0 = arith.constant 0 : i32
    %c0_i32_1 = arith.constant 0 : i32
    %c0_i32_2 = arith.constant 0 : i32
    return %arg0, %c0_i32, %c0_i32_0, %c0_i32_1 : i32, i32, i32, i32
  }
  func.func @transform_1(%arg0: i32, %arg1: i32) -> (i32, i32) {
    %c0_i32 = arith.constant 0 : i32
    %c0_i32_0 = arith.constant 0 : i32
    %c0_i32_1 = arith.constant 0 : i32
    return %c0_i32, %c0_i32_0 : i32, i32
  }
  func.func @transform_2(%arg0: i32, %arg1: i32) -> (i32, i32) {
    %c0_i32 = arith.constant 0 : i32
    %c0_i32_0 = arith.constant 0 : i32
    %c0_i32_1 = arith.constant 0 : i32
    return %c0_i32, %c0_i32_0 : i32, i32
  }
  func.func @transform_3(%arg0: i32, %arg1: i32) -> (i32, i32) {
    %c0_i32 = arith.constant 0 : i32
    %c0_i32_0 = arith.constant 0 : i32
    %c0_i32_1 = arith.constant 0 : i32
    return %c0_i32, %c0_i32_0 : i32, i32
  }
  func.func @transform_4(%arg0: i32, %arg1: i32) -> (i32, i32) {
    %c0_i32 = arith.constant 0 : i32
    %c0_i32_0 = arith.constant 0 : i32
    %c0_i32_1 = arith.constant 0 : i32
    return %c0_i32, %c0_i32_0 : i32, i32
  }
  func.func @transform_5(%arg0: i32, %arg1: i32) -> (i32, i32, i32) {
    %c0_i32 = arith.constant 0 : i32
    %c0_i32_0 = arith.constant 0 : i32
    return %arg0, %arg1, %c0_i32 : i32, i32, i32
  }
}

</mosaic_0001>

<llo_original>
// kernel: tpu_custom_call.1
$region0: #{tpu_custom_call.1}
  #allocation0 [shape = 'u32[]', space=smem, size = 0x4, offset = 0x4, fixed_abs, tag = 'smem constant byte address 0x4 - core index']
  #allocation1 [shape = 'u32[72,128]{1,0:T(1,128)}', space=vmem, size = 0x9000, scoped, tag = 'internal scratch']
  %s0 = inlined_call_operand.vmem [shape: f32[2,18,18,128], index: 0, kind: input, shape index: {}]
  %s1 = inlined_call_operand.vmem [shape: f32[9,128], index: 1, kind: input, shape index: {}]
  %s2 = inlined_call_operand.vmem [shape: f32[1,128], index: 2, kind: input, shape index: {}]
  %s3 = inlined_call_operand.vmem [shape: bf16[128,128], index: 3, kind: input, shape index: {}]
  %s4 = inlined_call_operand.vmem [shape: f32[1,128], index: 4, kind: input, shape index: {}]
  %s5 = inlined_call_operand.hbm [shape: f32[2,256,128], index: 5, kind: output, shape index: {}]
  %s6 = sld [smem:[#allocation0]]
  $region53: #{tpu_custom_call.1} parent=0
    _
  %s8 = ssub.s32 1, %s6
  %s9 = scalar_select 0, %s8, %s6
  $region1: #{tpu_custom_call.1} parent=0
    #allocation2 [shape = 'u8[131072]{0}', space=vmem, size = 0x20000, scoped, tag = 'output window, operand 0']
    #allocation3 [shape = 's32[2]{0}', space=sflag, size = 0x8, scoped, tag = 'scoped memory for tpu_custom_call.1']
    %10 = vsyncpa [#allocation3], 0
    %s11 = scalar_lea.sflag [#allocation3], 1
    %12 = vsyncpa %s11, 0
    loop: start=0, step=1, limit=6
    $region2: #{tpu_custom_call.1} parent=1 // loop_pre_header
      _
    $region3: #{tpu_custom_call.1} parent=1 // loop_header
      %s14 = sphi 0, %s18
      %p15 = scmp.ge.s32.totalorder %s14, 6
      %s21 = sphi 0, %s33
      %s22 = sphi 0, %s29
      %s23 = sphi 0, %s21
      %s24 = sphi 0, %s22
      %s25 = sphi 0, %s23
      %s26 = sphi 0, %s24
      %s36 = sphi 0, %s38
      %s39 = sphi 0, %s36
      %s40 = sphi 0, %s39
      %s56 = sphi 0, %s40
      %s60 = sphi 0, %s60
      %s62 = sphi 0, %s60
      %s63 = sphi 0, %s62
      %s77 = sphi 0, %s63
      %s81 = sphi 0, %s81
      %s83 = sphi 0, %s81
      %s84 = sphi 0, %s83
      %s98 = sphi 0, %s84
      %s102 = sphi 0, %s102
      %s104 = sphi 0, %s102
      %s105 = sphi 0, %s104
      %s119 = sphi 0, %s105
      %s123 = sphi 0, %s123
      %s125 = sphi 0, %s123
      %s126 = sphi 0, %s125
      %s140 = sphi 0, %s126
      %s148 = sphi 0, %s150
      %s151 = sphi 0, %s148
      %s152 = sphi 0, %s151
      %s168 = sphi 0, %s152
    $region4: #{tpu_custom_call.1} parent=1 // loop_header_branch
      %17 = sbr.rel (%p15) target = $region8
    $region5: #{tpu_custom_call.1} parent=1 // loop_body
      %s19 = ssub.s32 %s14, 1
      %s20 = ssub.s32 %s14, 2
      %s27 = sadd.s32 1, %s22
      %p28 = scmp.ge.s32.totalorder %s27, 2
      %s29 = scalar_select %p28, 0, %s27
      %s30 = sadd.s32 1, %s21
      %s31 = scalar_select %p28, %s30, %s21
      %p32 = scmp.ge.s32.totalorder %s31, 2
      %s33 = scalar_select %p32, 0, %s31
      %s34 = ssub.s32 %s21, %s33
      %p35 = scmp.eq.s32.totalorder %s34, 0
      %s37 = sadd.s32 %s36, 1
      %s38 = scalar_select %p35, %s36, %s37
      %p41 = pneg %p35
      %p42 = scmp.eq.s32.totalorder %s14, 3
      %p43 = por %p41, %p42
      %p44 = scmp.ne.s32.totalorder %s36, %s39
      %p45 = scmp.eq.s32.totalorder %s14, 0
      %p46 = por %p44, %p45
      %p47 = scmp.ne.s32.totalorder %s36, %s39
      %p48 = scmp.eq.s32.totalorder %s19, 3
      %p49 = por %p47, %p48
      %p50 = scmp.ne.s32.totalorder %s39, %s40
      %p51 = scmp.eq.s32.totalorder %s19, 0
      %p52 = por %p50, %p51
      %p53 = scmp.ne.s32.totalorder %s39, %s40
      %p54 = scmp.eq.s32.totalorder %s20, 3
      %p55 = por %p53, %p54
      %p57 = scmp.ne.s32.totalorder %s40, %s56
      %p58 = scmp.eq.s32.totalorder %s20, 0
      %p59 = por %p57, %p58
      %s61 = sadd.s32 %s60, 1
      %p64 = scmp.eq.s32.totalorder %s14, 3
      %p65 = scmp.ne.s32.totalorder %s60, %s62
      %p66 = scmp.eq.s32.totalorder %s14, 0
      %p67 = por %p65, %p66
      %p68 = scmp.ne.s32.totalorder %s60, %s62
      %p69 = scmp.eq.s32.totalorder %s19, 3
      %p70 = por %p68, %p69
      %p71 = scmp.ne.s32.totalorder %s62, %s63
      %p72 = scmp.eq.s32.totalorder %s19, 0
      %p73 = por %p71, %p72
      %p74 = scmp.ne.s32.totalorder %s62, %s63
      %p75 = scmp.eq.s32.totalorder %s20, 3
      %p76 = por %p74, %p75
      %p78 = scmp.ne.s32.totalorder %s63, %s77
      %p79 = scmp.eq.s32.totalorder %s20, 0
      %p80 = por %p78, %p79
      %s82 = sadd.s32 %s81, 1
      %p85 = scmp.eq.s32.totalorder %s14, 3
      %p86 = scmp.ne.s32.totalorder %s81, %s83
      %p87 = scmp.eq.s32.totalorder %s14, 0
      %p88 = por %p86, %p87
      %p89 = scmp.ne.s32.totalorder %s81, %s83
      %p90 = scmp.eq.s32.totalorder %s19, 3
      %p91 = por %p89, %p90
      %p92 = scmp.ne.s32.totalorder %s83, %s84
      %p93 = scmp.eq.s32.totalorder %s19, 0
      %p94 = por %p92, %p93
      %p95 = scmp.ne.s32.totalorder %s83, %s84
      %p96 = scmp.eq.s32.totalorder %s20, 3
      %p97 = por %p95, %p96
      %p99 = scmp.ne.s32.totalorder %s84, %s98
      %p100 = scmp.eq.s32.totalorder %s20, 0
      %p101 = por %p99, %p100
      %s103 = sadd.s32 %s102, 1
      %p106 = scmp.eq.s32.totalorder %s14, 3
      %p107 = scmp.ne.s32.totalorder %s102, %s104
      %p108 = scmp.eq.s32.totalorder %s14, 0
      %p109 = por %p107, %p108
      %p110 = scmp.ne.s32.totalorder %s102, %s104
      %p111 = scmp.eq.s32.totalorder %s19, 3
      %p112 = por %p110, %p111
      %p113 = scmp.ne.s32.totalorder %s104, %s105
      %p114 = scmp.eq.s32.totalorder %s19, 0
      %p115 = por %p113, %p114
      %p116 = scmp.ne.s32.totalorder %s104, %s105
      %p117 = scmp.eq.s32.totalorder %s20, 3
      %p118 = por %p116, %p117
      %p120 = scmp.ne.s32.totalorder %s105, %s119
      %p121 = scmp.eq.s32.totalorder %s20, 0
      %p122 = por %p120, %p121
      %s124 = sadd.s32 %s123, 1
      %p127 = scmp.eq.s32.totalorder %s14, 3
      %p128 = scmp.ne.s32.totalorder %s123, %s125
      %p129 = scmp.eq.s32.totalorder %s14, 0
      %p130 = por %p128, %p129
      %p131 = scmp.ne.s32.totalorder %s123, %s125
      %p132 = scmp.eq.s32.totalorder %s19, 3
      %p133 = por %p131, %p132
      %p134 = scmp.ne.s32.totalorder %s125, %s126
      %p135 = scmp.eq.s32.totalorder %s19, 0
      %p136 = por %p134, %p135
      %p137 = scmp.ne.s32.totalorder %s125, %s126
      %p138 = scmp.eq.s32.totalorder %s20, 3
      %p139 = por %p137, %p138
      %p141 = scmp.ne.s32.totalorder %s126, %s140
      %p142 = scmp.eq.s32.totalorder %s20, 0
      %p143 = por %p141, %p142
      %s144 = ssub.s32 %s21, %s33
      %s145 = ssub.s32 %s22, %s29
      %s146 = sor.u32 %s144, %s145
      %p147 = scmp.eq.s32.totalorder %s146, 0
      %s149 = sadd.s32 %s148, 1
      %s150 = scalar_select %p147, %s148, %s149
      %p153 = pneg %p147
      %p154 = scmp.eq.s32.totalorder %s14, 3
      %p155 = por %p153, %p154
      %p156 = scmp.ne.s32.totalorder %s148, %s151
      %p157 = scmp.eq.s32.totalorder %s14, 0
      %p158 = por %p156, %p157
      %p159 = scmp.ne.s32.totalorder %s148, %s151
      %p160 = scmp.eq.s32.totalorder %s19, 3
      %p161 = por %p159, %p160
      %p162 = scmp.ne.s32.totalorder %s151, %s152
      %p163 = scmp.eq.s32.totalorder %s19, 0
      %p164 = por %p162, %p163
      %p165 = scmp.ne.s32.totalorder %s151, %s152
      %p166 = scmp.eq.s32.totalorder %s20, 3
      %p167 = por %p165, %p166
      %p169 = scmp.ne.s32.totalorder %s152, %s168
      %p170 = scmp.eq.s32.totalorder %s20, 0
      %p171 = por %p169, %p170
      %p172 = scmp.le.s32.totalorder 1, %s14
      %p173 = scmp.lt.s32.totalorder %s14, 5
      %p174 = pnand %p172, %p173
      %p175 = pneg %p174
      // Predicated region
      $region9: #{tpu_custom_call.1} parent=5 // pred_check
        _
      $region10: #{tpu_custom_call.1} parent=5 // pred_check_branch
        %177 = sbr.rel (%p174) target = $region12
      $region11: #{tpu_custom_call.1} parent=5 // pred_region
        %s178 = ssub.s32 %s14, 1
        // Predicated region
        $region13: #{tpu_custom_call.1} parent=11 // pred_check
          %p179 = pneg %p73
        $region14: #{tpu_custom_call.1} parent=11 // pred_check_branch
          %181 = sbr.rel (%p179) target = $region16
        $region15: #{tpu_custom_call.1} parent=11 // pred_region
          _
        $region16: #{tpu_custom_call.1} parent=11 // pred_fallthru
          _
        // Predicated region
        $region17: #{tpu_custom_call.1} parent=11 // pred_check
          %p182 = pneg %p94
        $region18: #{tpu_custom_call.1} parent=11 // pred_check_branch
          %184 = sbr.rel (%p182) target = $region20
        $region19: #{tpu_custom_call.1} parent=11 // pred_region
          _
        $region20: #{tpu_custom_call.1} parent=11 // pred_fallthru
          _
        // Predicated region
        $region21: #{tpu_custom_call.1} parent=11 // pred_check
          %p185 = pneg %p115
        $region22: #{tpu_custom_call.1} parent=11 // pred_check_branch
          %187 = sbr.rel (%p185) target = $region24
        $region23: #{tpu_custom_call.1} parent=11 // pred_region
          _
        $region24: #{tpu_custom_call.1} parent=11 // pred_fallthru
          _
        // Predicated region
        $region25: #{tpu_custom_call.1} parent=11 // pred_check
          %p188 = pneg %p136
        $region26: #{tpu_custom_call.1} parent=11 // pred_check_branch
          %190 = sbr.rel (%p188) target = $region28
        $region27: #{tpu_custom_call.1} parent=11 // pred_region
          _
        $region28: #{tpu_custom_call.1} parent=11 // pred_fallthru
          _
      $region12: #{tpu_custom_call.1} parent=5 // pred_fallthru
        _
      %p191 = scmp.lt.s32.totalorder %s14, 4
      // Predicated region
      $region29: #{tpu_custom_call.1} parent=5 // pred_check
        %p192 = pneg %p191
      $region30: #{tpu_custom_call.1} parent=5 // pred_check_branch
        %194 = sbr.rel (%p192) target = $region32
      $region31: #{tpu_custom_call.1} parent=5 // pred_region
        // Predicated region
        $region33: #{tpu_custom_call.1} parent=31 // pred_check
          %p195 = pneg %p46
        $region34: #{tpu_custom_call.1} parent=31 // pred_check_branch
          %197 = sbr.rel (%p195) target = $region36
        $region35: #{tpu_custom_call.1} parent=31 // pred_region
          %p198 = scmp.lt.s32.totalorder %s21, 1
          %s199 = scalar_select %p198, %s21, 1
          %s200 = smul.addr %s199, 54
          %s201 = smul.addr %s200, 8
          %s202 = scalar_lea.vmem %s0, %s201
        $region36: #{tpu_custom_call.1} parent=31 // pred_fallthru
          _
      $region32: #{tpu_custom_call.1} parent=5 // pred_fallthru
        _
      %p203 = scmp.le.s32.totalorder 1, %s14
      %p204 = scmp.lt.s32.totalorder %s14, 5
      %p205 = pnand %p203, %p204
      %p206 = pneg %p205
      // Predicated region
      $region37: #{tpu_custom_call.1} parent=5 // pred_check
        _
      $region38: #{tpu_custom_call.1} parent=5 // pred_check_branch
        %208 = sbr.rel (%p205) target = $region40
      $region39: #{tpu_custom_call.1} parent=5 // pred_region
        %s209 = ssub.s32 %s14, 1
        %p210 = scmp.lt.s32.totalorder %s23, 1
        %s211 = scalar_select %p210, %s23, 1
        %s212 = smul.addr %s211, 54
        %s213 = smul.addr %s212, 8
        %s214 = scalar_lea.vmem %s0, %s213
        %p215 = pneg %p52
        %p216 = pneg %p49
        %p217 = pneg %p73
        %p218 = pneg %p70
        %p219 = pneg %p94
        %p220 = pneg %p91
        %p221 = pneg %p115
        %p222 = pneg %p112
        %p223 = pneg %p136
        %p224 = pneg %p133
        %p225 = pneg %p164
        %p226 = pneg %p161
        %s227 = sand.u32 %s151, 1
        %s228 = scalar_lea.sflag [#allocation3], %s227
        %s229 = sand.u32 %s151, 1
        %s230 = smul.addr %s229, 128
        %s231 = scalar_lea.vmem [#allocation2], %s230
        %p232 = scmp.lt.s32.totalorder %s23, 1
        %s233 = scalar_select %p232, %s23, 1
        %s234 = smul.addr %s233, 54
        %s235 = smul.addr %s234, 8
        %s236 = scalar_lea.vmem %s0, %s235
        %s237 = smul.u32 16, %s24
        %s238 = smul.u32 %s24, 8
        %v239 = vld [vmem:[%s1] sm:$0xff]
        %v240 = vld [vmem:[%s1 + $0x8] sm:$0x1]
        %s241 = smul.u32 %s238, 24
        %s242 = scalar_lea.vmem %s236, %s241
        %v243 = vld [vmem:[%s242] sm:$0xff]
        %v244 = vld [vmem:[%s242 + $0x8] sm:$0xff]
        %v245 = vld [vmem:[%s242 + $0x18] sm:$0xff]
        %v246 = vld [vmem:[%s242 + $0x20] sm:$0xff]
        %v247 = vld [vmem:[%s242 + $0x30] sm:$0xff]
        %v248 = vld [vmem:[%s242 + $0x38] sm:$0xff]
        %v249 = vld [vmem:[%s242 + $0x48] sm:$0xff]
        %v250 = vld [vmem:[%s242 + $0x50] sm:$0xff]
        %v251 = vld [vmem:[%s242 + $0x60] sm:$0xff]
        %v252 = vld [vmem:[%s242 + $0x68] sm:$0xff]
        %v253 = vld [vmem:[%s242 + $0x78] sm:$0xff]
        %v254 = vld [vmem:[%s242 + $0x80] sm:$0xff]
        %v255 = vld [vmem:[%s242 + $0x90] sm:$0xff]
        %v256 = vld [vmem:[%s242 + $0x98] sm:$0xff]
        %v257 = vld [vmem:[%s242 + $0xa8] sm:$0xff]
        %v258 = vld [vmem:[%s242 + $0xb0] sm:$0xff]
        %v259 = vperm.slane %v239, 0
        %v260 = vmul.f32 %v243, %v259
        %v261 = vmul.f32 %v244, %v259
        %v262 = vmul.f32 %v245, %v259
        %v263 = vmul.f32 %v246, %v259
        %v264 = vmul.f32 %v247, %v259
        %v265 = vmul.f32 %v248, %v259
        %v266 = vmul.f32 %v249, %v259
        %v267 = vmul.f32 %v250, %v259
        %v268 = vmul.f32 %v251, %v259
        %v269 = vmul.f32 %v252, %v259
        %v270 = vmul.f32 %v253, %v259
        %v271 = vmul.f32 %v254, %v259
        %v272 = vmul.f32 %v255, %v259
        %v273 = vmul.f32 %v256, %v259
        %v274 = vmul.f32 %v257, %v259
        %v275 = vmul.f32 %v258, %v259
        %v276 = vadd.f32 %v260, 0.0
        %v277 = vadd.f32 %v261, 0.0
        %v278 = vadd.f32 %v262, 0.0
        %v279 = vadd.f32 %v263, 0.0
        %v280 = vadd.f32 %v264, 0.0
        %v281 = vadd.f32 %v265, 0.0
        %v282 = vadd.f32 %v266, 0.0
        %v283 = vadd.f32 %v267, 0.0
        %v284 = vadd.f32 %v268, 0.0
        %v285 = vadd.f32 %v269, 0.0
        %v286 = vadd.f32 %v270, 0.0
        %v287 = vadd.f32 %v271, 0.0
        %v288 = vadd.f32 %v272, 0.0
        %v289 = vadd.f32 %v273, 0.0
        %v290 = vadd.f32 %v274, 0.0
        %v291 = vadd.f32 %v275, 0.0
        %v292 = vld [vmem:[%s242 + $0x1] sm:$0xff]
        %v293 = vld [vmem:[%s242 + $0x9] sm:$0xff]
        %v294 = vld [vmem:[%s242 + $0x19] sm:$0xff]
        %v295 = vld [vmem:[%s242 + $0x21] sm:$0xff]
        %v296 = vld [vmem:[%s242 + $0x31] sm:$0xff]
        %v297 = vld [vmem:[%s242 + $0x39] sm:$0xff]
        %v298 = vld [vmem:[%s242 + $0x49] sm:$0xff]
        %v299 = vld [vmem:[%s242 + $0x51] sm:$0xff]
        %v300 = vld [vmem:[%s242 + $0x61] sm:$0xff]
        %v301 = vld [vmem:[%s242 + $0x69] sm:$0xff]
        %v302 = vld [vmem:[%s242 + $0x79] sm:$0xff]
        %v303 = vld [vmem:[%s242 + $0x81] sm:$0xff]
        %v304 = vld [vmem:[%s242 + $0x91] sm:$0xff]
        %v305 = vld [vmem:[%s242 + $0x99] sm:$0xff]
        %v306 = vld [vmem:[%s242 + $0xa9] sm:$0xff]
        %v307 = vld [vmem:[%s242 + $0xb1] sm:$0xff]
        %v308 = vperm.slane %v239, 1
        %v309 = vmul.f32 %v292, %v308
        %v310 = vmul.f32 %v293, %v308
        %v311 = vmul.f32 %v294, %v308
        %v312 = vmul.f32 %v295, %v308
        %v313 = vmul.f32 %v296, %v308
        %v314 = vmul.f32 %v297, %v308
        %v315 = vmul.f32 %v298, %v308
        %v316 = vmul.f32 %v299, %v308
        %v317 = vmul.f32 %v300, %v308
        %v318 = vmul.f32 %v301, %v308
        %v319 = vmul.f32 %v302, %v308
        %v320 = vmul.f32 %v303, %v308
        %v321 = vmul.f32 %v304, %v308
        %v322 = vmul.f32 %v305, %v308
        %v323 = vmul.f32 %v306, %v308
        %v324 = vmul.f32 %v307, %v308
        %v325 = vadd.f32 %v276, %v309
        %v326 = vadd.f32 %v277, %v310
        %v327 = vadd.f32 %v278, %v311
        %v328 = vadd.f32 %v279, %v312
        %v329 = vadd.f32 %v280, %v313
        %v330 = vadd.f32 %v281, %v314
        %v331 = vadd.f32 %v282, %v315
        %v332 = vadd.f32 %v283, %v316
        %v333 = vadd.f32 %v284, %v317
        %v334 = vadd.f32 %v285, %v318
        %v335 = vadd.f32 %v286, %v319
        %v336 = vadd.f32 %v287, %v320
        %v337 = vadd.f32 %v288, %v321
        %v338 = vadd.f32 %v289, %v322
        %v339 = vadd.f32 %v290, %v323
        %v340 = vadd.f32 %v291, %v324
        %v341 = vld [vmem:[%s242 + $0x2] sm:$0xff]
        %v342 = vld [vmem:[%s242 + $0xa] sm:$0xff]
        %v343 = vld [vmem:[%s242 + $0x1a] sm:$0xff]
        %v344 = vld [vmem:[%s242 + $0x22] sm:$0xff]
        %v345 = vld [vmem:[%s242 + $0x32] sm:$0xff]
        %v346 = vld [vmem:[%s242 + $0x3a] sm:$0xff]
        %v347 = vld [vmem:[%s242 + $0x4a] sm:$0xff]
        %v348 = vld [vmem:[%s242 + $0x52] sm:$0xff]
        %v349 = vld [vmem:[%s242 + $0x62] sm:$0xff]
        %v350 = vld [vmem:[%s242 + $0x6a] sm:$0xff]
        %v351 = vld [vmem:[%s242 + $0x7a] sm:$0xff]
        %v352 = vld [vmem:[%s242 + $0x82] sm:$0xff]
        %v353 = vld [vmem:[%s242 + $0x92] sm:$0xff]
        %v354 = vld [vmem:[%s242 + $0x9a] sm:$0xff]
        %v355 = vld [vmem:[%s242 + $0xaa] sm:$0xff]
        %v356 = vld [vmem:[%s242 + $0xb2] sm:$0xff]
        %v357 = vperm.slane %v239, 2
        %v358 = vmul.f32 %v341, %v357
        %v359 = vmul.f32 %v342, %v357
        %v360 = vmul.f32 %v343, %v357
        %v361 = vmul.f32 %v344, %v357
        %v362 = vmul.f32 %v345, %v357
        %v363 = vmul.f32 %v346, %v357
        %v364 = vmul.f32 %v347, %v357
        %v365 = vmul.f32 %v348, %v357
        %v366 = vmul.f32 %v349, %v357
        %v367 = vmul.f32 %v350, %v357
        %v368 = vmul.f32 %v351, %v357
        %v369 = vmul.f32 %v352, %v357
        %v370 = vmul.f32 %v353, %v357
        %v371 = vmul.f32 %v354, %v357
        %v372 = vmul.f32 %v355, %v357
        %v373 = vmul.f32 %v356, %v357
        %v374 = vadd.f32 %v325, %v358
        %v375 = vadd.f32 %v326, %v359
        %v376 = vadd.f32 %v327, %v360
        %v377 = vadd.f32 %v328, %v361
        %v378 = vadd.f32 %v329, %v362
        %v379 = vadd.f32 %v330, %v363
        %v380 = vadd.f32 %v331, %v364
        %v381 = vadd.f32 %v332, %v365
        %v382 = vadd.f32 %v333, %v366
        %v383 = vadd.f32 %v334, %v367
        %v384 = vadd.f32 %v335, %v368
        %v385 = vadd.f32 %v336, %v369
        %v386 = vadd.f32 %v337, %v370
        %v387 = vadd.f32 %v338, %v371
        %v388 = vadd.f32 %v339, %v372
        %v389 = vadd.f32 %v340, %v373
        %s390 = sadd.s32 %s238, 1
        %s391 = smul.u32 %s390, 24
        %s392 = scalar_lea.vmem %s236, %s391
        %v393 = vld [vmem:[%s392] sm:$0xff]
        %v394 = vld [vmem:[%s392 + $0x8] sm:$0xff]
        %v395 = vld [vmem:[%s392 + $0x18] sm:$0xff]
        %v396 = vld [vmem:[%s392 + $0x20] sm:$0xff]
        %v397 = vld [vmem:[%s392 + $0x30] sm:$0xff]
        %v398 = vld [vmem:[%s392 + $0x38] sm:$0xff]
        %v399 = vld [vmem:[%s392 + $0x48] sm:$0xff]
        %v400 = vld [vmem:[%s392 + $0x50] sm:$0xff]
        %v401 = vld [vmem:[%s392 + $0x60] sm:$0xff]
        %v402 = vld [vmem:[%s392 + $0x68] sm:$0xff]
        %v403 = vld [vmem:[%s392 + $0x78] sm:$0xff]
        %v404 = vld [vmem:[%s392 + $0x80] sm:$0xff]
        %v405 = vld [vmem:[%s392 + $0x90] sm:$0xff]
        %v406 = vld [vmem:[%s392 + $0x98] sm:$0xff]
        %v407 = vld [vmem:[%s392 + $0xa8] sm:$0xff]
        %v408 = vld [vmem:[%s392 + $0xb0] sm:$0xff]
        %v409 = vperm.slane %v239, 3
        %v410 = vmul.f32 %v393, %v409
        %v411 = vmul.f32 %v394, %v409
        %v412 = vmul.f32 %v395, %v409
        %v413 = vmul.f32 %v396, %v409
        %v414 = vmul.f32 %v397, %v409
        %v415 = vmul.f32 %v398, %v409
        %v416 = vmul.f32 %v399, %v409
        %v417 = vmul.f32 %v400, %v409
        %v418 = vmul.f32 %v401, %v409
        %v419 = vmul.f32 %v402, %v409
        %v420 = vmul.f32 %v403, %v409
        %v421 = vmul.f32 %v404, %v409
        %v422 = vmul.f32 %v405, %v409
        %v423 = vmul.f32 %v406, %v409
        %v424 = vmul.f32 %v407, %v409
        %v425 = vmul.f32 %v408, %v409
        %v426 = vadd.f32 %v374, %v410
        %v427 = vadd.f32 %v375, %v411
        %v428 = vadd.f32 %v376, %v412
        %v429 = vadd.f32 %v377, %v413
        %v430 = vadd.f32 %v378, %v414
        %v431 = vadd.f32 %v379, %v415
        %v432 = vadd.f32 %v380, %v416
        %v433 = vadd.f32 %v381, %v417
        %v434 = vadd.f32 %v382, %v418
        %v435 = vadd.f32 %v383, %v419
        %v436 = vadd.f32 %v384, %v420
        %v437 = vadd.f32 %v385, %v421
        %v438 = vadd.f32 %v386, %v422
        %v439 = vadd.f32 %v387, %v423
        %v440 = vadd.f32 %v388, %v424
        %v441 = vadd.f32 %v389, %v425
        %v442 = vld [vmem:[%s392 + $0x1] sm:$0xff]
        %v443 = vld [vmem:[%s392 + $0x9] sm:$0xff]
        %v444 = vld [vmem:[%s392 + $0x19] sm:$0xff]
        %v445 = vld [vmem:[%s392 + $0x21] sm:$0xff]
        %v446 = vld [vmem:[%s392 + $0x31] sm:$0xff]
        %v447 = vld [vmem:[%s392 + $0x39] sm:$0xff]
        %v448 = vld [vmem:[%s392 + $0x49] sm:$0xff]
        %v449 = vld [vmem:[%s392 + $0x51] sm:$0xff]
        %v450 = vld [vmem:[%s392 + $0x61] sm:$0xff]
        %v451 = vld [vmem:[%s392 + $0x69] sm:$0xff]
        %v452 = vld [vmem:[%s392 + $0x79] sm:$0xff]
        %v453 = vld [vmem:[%s392 + $0x81] sm:$0xff]
        %v454 = vld [vmem:[%s392 + $0x91] sm:$0xff]
        %v455 = vld [vmem:[%s392 + $0x99] sm:$0xff]
        %v456 = vld [vmem:[%s392 + $0xa9] sm:$0xff]
        %v457 = vld [vmem:[%s392 + $0xb1] sm:$0xff]
        %v458 = vperm.slane %v239, 4
        %v459 = vmul.f32 %v442, %v458
        %v460 = vmul.f32 %v443, %v458
        %v461 = vmul.f32 %v444, %v458
        %v462 = vmul.f32 %v445, %v458
        %v463 = vmul.f32 %v446, %v458
        %v464 = vmul.f32 %v447, %v458
        %v465 = vmul.f32 %v448, %v458
        %v466 = vmul.f32 %v449, %v458
        %v467 = vmul.f32 %v450, %v458
        %v468 = vmul.f32 %v451, %v458
        %v469 = vmul.f32 %v452, %v458
        %v470 = vmul.f32 %v453, %v458
        %v471 = vmul.f32 %v454, %v458
        %v472 = vmul.f32 %v455, %v458
        %v473 = vmul.f32 %v456, %v458
        %v474 = vmul.f32 %v457, %v458
        %v475 = vadd.f32 %v426, %v459
        %v476 = vadd.f32 %v427, %v460
        %v477 = vadd.f32 %v428, %v461
        %v478 = vadd.f32 %v429, %v462
        %v479 = vadd.f32 %v430, %v463
        %v480 = vadd.f32 %v431, %v464
        %v481 = vadd.f32 %v432, %v465
        %v482 = vadd.f32 %v433, %v466
        %v483 = vadd.f32 %v434, %v467
        %v484 = vadd.f32 %v435, %v468
        %v485 = vadd.f32 %v436, %v469
        %v486 = vadd.f32 %v437, %v470
        %v487 = vadd.f32 %v438, %v471
        %v488 = vadd.f32 %v439, %v472
        %v489 = vadd.f32 %v440, %v473
        %v490 = vadd.f32 %v441, %v474
        %v491 = vld [vmem:[%s392 + $0x2] sm:$0xff]
        %v492 = vld [vmem:[%s392 + $0xa] sm:$0xff]
        %v493 = vld [vmem:[%s392 + $0x1a] sm:$0xff]
        %v494 = vld [vmem:[%s392 + $0x22] sm:$0xff]
        %v495 = vld [vmem:[%s392 + $0x32] sm:$0xff]
        %v496 = vld [vmem:[%s392 + $0x3a] sm:$0xff]
        %v497 = vld [vmem:[%s392 + $0x4a] sm:$0xff]
        %v498 = vld [vmem:[%s392 + $0x52] sm:$0xff]
        %v499 = vld [vmem:[%s392 + $0x62] sm:$0xff]
        %v500 = vld [vmem:[%s392 + $0x6a] sm:$0xff]
        %v501 = vld [vmem:[%s392 + $0x7a] sm:$0xff]
        %v502 = vld [vmem:[%s392 + $0x82] sm:$0xff]
        %v503 = vld [vmem:[%s392 + $0x92] sm:$0xff]
        %v504 = vld [vmem:[%s392 + $0x9a] sm:$0xff]
        %v505 = vld [vmem:[%s392 + $0xaa] sm:$0xff]
        %v506 = vld [vmem:[%s392 + $0xb2] sm:$0xff]
        %v507 = vperm.slane %v239, 5
        %v508 = vmul.f32 %v491, %v507
        %v509 = vmul.f32 %v492, %v507
        %v510 = vmul.f32 %v493, %v507
        %v511 = vmul.f32 %v494, %v507
        %v512 = vmul.f32 %v495, %v507
        %v513 = vmul.f32 %v496, %v507
        %v514 = vmul.f32 %v497, %v507
        %v515 = vmul.f32 %v498, %v507
        %v516 = vmul.f32 %v499, %v507
        %v517 = vmul.f32 %v500, %v507
        %v518 = vmul.f32 %v501, %v507
        %v519 = vmul.f32 %v502, %v507
        %v520 = vmul.f32 %v503, %v507
        %v521 = vmul.f32 %v504, %v507
        %v522 = vmul.f32 %v505, %v507
        %v523 = vmul.f32 %v506, %v507
        %v524 = vadd.f32 %v475, %v508
        %v525 = vadd.f32 %v476, %v509
        %v526 = vadd.f32 %v477, %v510
        %v527 = vadd.f32 %v478, %v511
        %v528 = vadd.f32 %v479, %v512
        %v529 = vadd.f32 %v480, %v513
        %v530 = vadd.f32 %v481, %v514
        %v531 = vadd.f32 %v482, %v515
        %v532 = vadd.f32 %v483, %v516
        %v533 = vadd.f32 %v484, %v517
        %v534 = vadd.f32 %v485, %v518
        %v535 = vadd.f32 %v486, %v519
        %v536 = vadd.f32 %v487, %v520
        %v537 = vadd.f32 %v488, %v521
        %v538 = vadd.f32 %v489, %v522
        %v539 = vadd.f32 %v490, %v523
        %s540 = sadd.s32 %s238, 2
        %s541 = smul.u32 %s540, 24
        %s542 = scalar_lea.vmem %s236, %s541
        %v543 = vld [vmem:[%s542] sm:$0xff]
        %v544 = vld [vmem:[%s542 + $0x8] sm:$0xff]
        %v545 = vld [vmem:[%s542 + $0x18] sm:$0xff]
        %v546 = vld [vmem:[%s542 + $0x20] sm:$0xff]
        %v547 = vld [vmem:[%s542 + $0x30] sm:$0xff]
        %v548 = vld [vmem:[%s542 + $0x38] sm:$0xff]
        %v549 = vld [vmem:[%s542 + $0x48] sm:$0xff]
        %v550 = vld [vmem:[%s542 + $0x50] sm:$0xff]
        %v551 = vld [vmem:[%s542 + $0x60] sm:$0xff]
        %v552 = vld [vmem:[%s542 + $0x68] sm:$0xff]
        %v553 = vld [vmem:[%s542 + $0x78] sm:$0xff]
        %v554 = vld [vmem:[%s542 + $0x80] sm:$0xff]
        %v555 = vld [vmem:[%s542 + $0x90] sm:$0xff]
        %v556 = vld [vmem:[%s542 + $0x98] sm:$0xff]
        %v557 = vld [vmem:[%s542 + $0xa8] sm:$0xff]
        %v558 = vld [vmem:[%s542 + $0xb0] sm:$0xff]
        %v559 = vperm.slane %v239, 6
        %v560 = vmul.f32 %v543, %v559
        %v561 = vmul.f32 %v544, %v559
        %v562 = vmul.f32 %v545, %v559
        %v563 = vmul.f32 %v546, %v559
        %v564 = vmul.f32 %v547, %v559
        %v565 = vmul.f32 %v548, %v559
        %v566 = vmul.f32 %v549, %v559
        %v567 = vmul.f32 %v550, %v559
        %v568 = vmul.f32 %v551, %v559
        %v569 = vmul.f32 %v552, %v559
        %v570 = vmul.f32 %v553, %v559
        %v571 = vmul.f32 %v554, %v559
        %v572 = vmul.f32 %v555, %v559
        %v573 = vmul.f32 %v556, %v559
        %v574 = vmul.f32 %v557, %v559
        %v575 = vmul.f32 %v558, %v559
        %v576 = vadd.f32 %v524, %v560
        %v577 = vadd.f32 %v525, %v561
        %v578 = vadd.f32 %v526, %v562
        %v579 = vadd.f32 %v527, %v563
        %v580 = vadd.f32 %v528, %v564
        %v581 = vadd.f32 %v529, %v565
        %v582 = vadd.f32 %v530, %v566
        %v583 = vadd.f32 %v531, %v567
        %v584 = vadd.f32 %v532, %v568
        %v585 = vadd.f32 %v533, %v569
        %v586 = vadd.f32 %v534, %v570
        %v587 = vadd.f32 %v535, %v571
        %v588 = vadd.f32 %v536, %v572
        %v589 = vadd.f32 %v537, %v573
        %v590 = vadd.f32 %v538, %v574
        %v591 = vadd.f32 %v539, %v575
        %v592 = vld [vmem:[%s542 + $0x1] sm:$0xff]
        %v593 = vld [vmem:[%s542 + $0x9] sm:$0xff]
        %v594 = vld [vmem:[%s542 + $0x19] sm:$0xff]
        %v595 = vld [vmem:[%s542 + $0x21] sm:$0xff]
        %v596 = vld [vmem:[%s542 + $0x31] sm:$0xff]
        %v597 = vld [vmem:[%s542 + $0x39] sm:$0xff]
        %v598 = vld [vmem:[%s542 + $0x49] sm:$0xff]
        %v599 = vld [vmem:[%s542 + $0x51] sm:$0xff]
        %v600 = vld [vmem:[%s542 + $0x61] sm:$0xff]
        %v601 = vld [vmem:[%s542 + $0x69] sm:$0xff]
        %v602 = vld [vmem:[%s542 + $0x79] sm:$0xff]
        %v603 = vld [vmem:[%s542 + $0x81] sm:$0xff]
        %v604 = vld [vmem:[%s542 + $0x91] sm:$0xff]
        %v605 = vld [vmem:[%s542 + $0x99] sm:$0xff]
        %v606 = vld [vmem:[%s542 + $0xa9] sm:$0xff]
        %v607 = vld [vmem:[%s542 + $0xb1] sm:$0xff]
        %v608 = vperm.slane %v239, 7
        %v609 = vmul.f32 %v592, %v608
        %v610 = vmul.f32 %v593, %v608
        %v611 = vmul.f32 %v594, %v608
        %v612 = vmul.f32 %v595, %v608
        %v613 = vmul.f32 %v596, %v608
        %v614 = vmul.f32 %v597, %v608
        %v615 = vmul.f32 %v598, %v608
        %v616 = vmul.f32 %v599, %v608
        %v617 = vmul.f32 %v600, %v608
        %v618 = vmul.f32 %v601, %v608
        %v619 = vmul.f32 %v602, %v608
        %v620 = vmul.f32 %v603, %v608
        %v621 = vmul.f32 %v604, %v608
        %v622 = vmul.f32 %v605, %v608
        %v623 = vmul.f32 %v606, %v608
        %v624 = vmul.f32 %v607, %v608
        %v625 = vadd.f32 %v576, %v609
        %v626 = vadd.f32 %v577, %v610
        %v627 = vadd.f32 %v578, %v611
        %v628 = vadd.f32 %v579, %v612
        %v629 = vadd.f32 %v580, %v613
        %v630 = vadd.f32 %v581, %v614
        %v631 = vadd.f32 %v582, %v615
        %v632 = vadd.f32 %v583, %v616
        %v633 = vadd.f32 %v584, %v617
        %v634 = vadd.f32 %v585, %v618
        %v635 = vadd.f32 %v586, %v619
        %v636 = vadd.f32 %v587, %v620
        %v637 = vadd.f32 %v588, %v621
        %v638 = vadd.f32 %v589, %v622
        %v639 = vadd.f32 %v590, %v623
        %v640 = vadd.f32 %v591, %v624
        %v641 = vld [vmem:[%s542 + $0x2] sm:$0xff]
        %v642 = vld [vmem:[%s542 + $0xa] sm:$0xff]
        %v643 = vld [vmem:[%s542 + $0x1a] sm:$0xff]
        %v644 = vld [vmem:[%s542 + $0x22] sm:$0xff]
        %v645 = vld [vmem:[%s542 + $0x32] sm:$0xff]
        %v646 = vld [vmem:[%s542 + $0x3a] sm:$0xff]
        %v647 = vld [vmem:[%s542 + $0x4a] sm:$0xff]
        %v648 = vld [vmem:[%s542 + $0x52] sm:$0xff]
        %v649 = vld [vmem:[%s542 + $0x62] sm:$0xff]
        %v650 = vld [vmem:[%s542 + $0x6a] sm:$0xff]
        %v651 = vld [vmem:[%s542 + $0x7a] sm:$0xff]
        %v652 = vld [vmem:[%s542 + $0x82] sm:$0xff]
        %v653 = vld [vmem:[%s542 + $0x92] sm:$0xff]
        %v654 = vld [vmem:[%s542 + $0x9a] sm:$0xff]
        %v655 = vld [vmem:[%s542 + $0xaa] sm:$0xff]
        %v656 = vld [vmem:[%s542 + $0xb2] sm:$0xff]
        %v657 = vperm.slane %v240, 0
        %v658 = vmul.f32 %v641, %v657
        %v659 = vmul.f32 %v642, %v657
        %v660 = vmul.f32 %v643, %v657
        %v661 = vmul.f32 %v644, %v657
        %v662 = vmul.f32 %v645, %v657
        %v663 = vmul.f32 %v646, %v657
        %v664 = vmul.f32 %v647, %v657
        %v665 = vmul.f32 %v648, %v657
        %v666 = vmul.f32 %v649, %v657
        %v667 = vmul.f32 %v650, %v657
        %v668 = vmul.f32 %v651, %v657
        %v669 = vmul.f32 %v652, %v657
        %v670 = vmul.f32 %v653, %v657
        %v671 = vmul.f32 %v654, %v657
        %v672 = vmul.f32 %v655, %v657
        %v673 = vmul.f32 %v656, %v657
        %v674 = vadd.f32 %v625, %v658
        %v675 = vadd.f32 %v626, %v659
        %v676 = vadd.f32 %v627, %v660
        %v677 = vadd.f32 %v628, %v661
        %v678 = vadd.f32 %v629, %v662
        %v679 = vadd.f32 %v630, %v663
        %v680 = vadd.f32 %v631, %v664
        %v681 = vadd.f32 %v632, %v665
        %v682 = vadd.f32 %v633, %v666
        %v683 = vadd.f32 %v634, %v667
        %v684 = vadd.f32 %v635, %v668
        %v685 = vadd.f32 %v636, %v669
        %v686 = vadd.f32 %v637, %v670
        %v687 = vadd.f32 %v638, %v671
        %v688 = vadd.f32 %v639, %v672
        %v689 = vadd.f32 %v640, %v673
        %v690 = vld [vmem:[%s2] sm:$0x1]
        %v692 = vperm.slane %v690, 0
        %v694 = vadd.f32 %v674, %v692
        %v695 = vadd.f32 %v675, %v692
        %v696 = vadd.f32 %v676, %v692
        %v697 = vadd.f32 %v677, %v692
        %v698 = vadd.f32 %v678, %v692
        %v699 = vadd.f32 %v679, %v692
        %v700 = vadd.f32 %v680, %v692
        %v701 = vadd.f32 %v681, %v692
        %v702 = vadd.f32 %v682, %v692
        %v703 = vadd.f32 %v683, %v692
        %v704 = vadd.f32 %v684, %v692
        %v705 = vadd.f32 %v685, %v692
        %v706 = vadd.f32 %v686, %v692
        %v707 = vadd.f32 %v687, %v692
        %v708 = vadd.f32 %v688, %v692
        %v709 = vadd.f32 %v689, %v692
        %v710 = vmax.f32 %v694, 0.0
        %v711 = vmax.f32 %v695, 0.0
        %v712 = vmax.f32 %v696, 0.0
        %v713 = vmax.f32 %v697, 0.0
        %v714 = vmax.f32 %v698, 0.0
        %v715 = vmax.f32 %v699, 0.0
        %v716 = vmax.f32 %v700, 0.0
        %v717 = vmax.f32 %v701, 0.0
        %v718 = vmax.f32 %v702, 0.0
        %v719 = vmax.f32 %v703, 0.0
        %v720 = vmax.f32 %v704, 0.0
        %v721 = vmax.f32 %v705, 0.0
        %v722 = vmax.f32 %v706, 0.0
        %v723 = vmax.f32 %v707, 0.0
        %v724 = vmax.f32 %v708, 0.0
        %v725 = vmax.f32 %v709, 0.0
        %v726 = vpack.c.bf16 %v711, %v710
        %v727 = vpack.c.bf16 %v713, %v712
        %v728 = vpack.c.bf16 %v715, %v714
        %v729 = vpack.c.bf16 %v717, %v716
        %v730 = vpack.c.bf16 %v719, %v718
        %v731 = vpack.c.bf16 %v721, %v720
        %v732 = vpack.c.bf16 %v723, %v722
        %v733 = vpack.c.bf16 %v725, %v724
        %v734 = vld [vmem:[%s3] sm:$0xf]
        %v735 = vld [vmem:[%s3 + $0x4] sm:$0xf]
        %v736 = vld [vmem:[%s3 + $0x8] sm:$0xf]
        %v737 = vld [vmem:[%s3 + $0xc] sm:$0xf]
        %v738 = vld [vmem:[%s3 + $0x10] sm:$0xf]
        %v739 = vld [vmem:[%s3 + $0x14] sm:$0xf]
        %v740 = vld [vmem:[%s3 + $0x18] sm:$0xf]
        %v741 = vld [vmem:[%s3 + $0x1c] sm:$0xf]
        %v742 = vld [vmem:[%s3 + $0x20] sm:$0xf]
        %v743 = vld [vmem:[%s3 + $0x24] sm:$0xf]
        %v744 = vld [vmem:[%s3 + $0x28] sm:$0xf]
        %v745 = vld [vmem:[%s3 + $0x2c] sm:$0xf]
        %v746 = vld [vmem:[%s3 + $0x30] sm:$0xf]
        %v747 = vld [vmem:[%s3 + $0x34] sm:$0xf]
        %v748 = vld [vmem:[%s3 + $0x38] sm:$0xf]
        %v749 = vld [vmem:[%s3 + $0x3c] sm:$0xf]
        %v750 = vld [vmem:[%s4] sm:$0x1]
        %v752 = vperm.slane %v750, 0
        %v770 = vunpack.c.l.b16 %v734
        %v771 = vunpack.c.l.b16 %v735
        %v772 = vunpack.c.l.b16 %v736
        %v773 = vunpack.c.l.b16 %v737
        %v774 = vunpack.c.l.b16 %v738
        %v775 = vunpack.c.l.b16 %v739
        %v776 = vunpack.c.l.b16 %v740
        %v777 = vunpack.c.l.b16 %v741
        %v778 = vunpack.c.l.b16 %v742
        %v779 = vunpack.c.l.b16 %v743
        %v780 = vunpack.c.l.b16 %v744
        %v781 = vunpack.c.l.b16 %v745
        %v782 = vunpack.c.l.b16 %v746
        %v783 = vunpack.c.l.b16 %v747
        %v784 = vunpack.c.l.b16 %v748
        %v785 = vunpack.c.l.b16 %v749
        %v786 = vpack.c.b16 %v771, %v770
        %v787 = vpack.c.b16 %v773, %v772
        %v788 = vpack.c.b16 %v775, %v774
        %v789 = vpack.c.b16 %v777, %v776
        %v790 = vpack.c.b16 %v779, %v778
        %v791 = vpack.c.b16 %v781, %v780
        %v792 = vpack.c.b16 %v783, %v782
        %v793 = vpack.c.b16 %v785, %v784
        %802 = vmatpush.bf16.msra.mxu0 %v793
        %803 = vmatpush.bf16.msra.mxu0 %v792
        %804 = vmatpush.bf16.msra.mxu0 %v791
        %805 = vmatpush.bf16.msra.mxu0 %v790
        %806 = vmatpush.bf16.msra.mxu0 %v789
        %807 = vmatpush.bf16.msra.mxu0 %v788
        %808 = vmatpush.bf16.msra.mxu0 %v787
        %809 = vmatpush.bf16.msra.mxu0 %v786
        %810 = vmatmul.bf16.gmra.mxu0 %v726
        %v811 = vpop.f32.mrf.mxu0
        %v812 = vadd.f32 %v752, %v811
        %v813 = vpop.f32.mrf.mxu0
        %v814 = vadd.f32 %v752, %v813
        %815 = vmatmul.bf16.gmra.mxu0 %v727
        %v816 = vpop.f32.mrf.mxu0
        %v817 = vadd.f32 %v752, %v816
        %v818 = vpop.f32.mrf.mxu0
        %v819 = vadd.f32 %v752, %v818
        %820 = vmatmul.bf16.gmra.mxu0 %v728
        %v821 = vpop.f32.mrf.mxu0
        %v822 = vadd.f32 %v752, %v821
        %v823 = vpop.f32.mrf.mxu0
        %v824 = vadd.f32 %v752, %v823
        %825 = vmatmul.bf16.gmra.mxu0 %v729
        %v826 = vpop.f32.mrf.mxu0
        %v827 = vadd.f32 %v752, %v826
        %v828 = vpop.f32.mrf.mxu0
        %v829 = vadd.f32 %v752, %v828
        %830 = vmatmul.bf16.gmra.mxu0 %v730
        %v831 = vpop.f32.mrf.mxu0
        %v832 = vadd.f32 %v752, %v831
        %v833 = vpop.f32.mrf.mxu0
        %v834 = vadd.f32 %v752, %v833
        %835 = vmatmul.bf16.gmra.mxu0 %v731
        %v836 = vpop.f32.mrf.mxu0
        %v837 = vadd.f32 %v752, %v836
        %v838 = vpop.f32.mrf.mxu0
        %v839 = vadd.f32 %v752, %v838
        %840 = vmatmul.bf16.gmra.mxu0 %v732
        %v841 = vpop.f32.mrf.mxu0
        %v842 = vadd.f32 %v752, %v841
        %v843 = vpop.f32.mrf.mxu0
        %v844 = vadd.f32 %v752, %v843
        %845 = vmatmul.bf16.gmra.mxu0 %v733
        %v846 = vpop.f32.mrf.mxu0
        %v847 = vadd.f32 %v752, %v846
        %v848 = vpop.f32.mrf.mxu0
        %v849 = vadd.f32 %v752, %v848
        %850 = vdwg.mxu0
        %v851 = vmax.f32 %v812, 0.0
        %v852 = vmax.f32 %v814, 0.0
        %v853 = vmax.f32 %v817, 0.0
        %v854 = vmax.f32 %v819, 0.0
        %v855 = vmax.f32 %v822, 0.0
        %v856 = vmax.f32 %v824, 0.0
        %v857 = vmax.f32 %v827, 0.0
        %v858 = vmax.f32 %v829, 0.0
        %v859 = vmax.f32 %v832, 0.0
        %v860 = vmax.f32 %v834, 0.0
        %v861 = vmax.f32 %v837, 0.0
        %v862 = vmax.f32 %v839, 0.0
        %v863 = vmax.f32 %v842, 0.0
        %v864 = vmax.f32 %v844, 0.0
        %v865 = vmax.f32 %v847, 0.0
        %v866 = vmax.f32 %v849, 0.0
        %867 = vst [vmem:[%s231] sm:$0xff] %v851
        %868 = vst [vmem:[%s231 + $0x8] sm:$0xff] %v852
        %869 = vst [vmem:[%s231 + $0x10] sm:$0xff] %v853
        %870 = vst [vmem:[%s231 + $0x18] sm:$0xff] %v854
        %871 = vst [vmem:[%s231 + $0x20] sm:$0xff] %v855
        %872 = vst [vmem:[%s231 + $0x28] sm:$0xff] %v856
        %873 = vst [vmem:[%s231 + $0x30] sm:$0xff] %v857
        %874 = vst [vmem:[%s231 + $0x38] sm:$0xff] %v858
        %875 = vst [vmem:[%s231 + $0x40] sm:$0xff] %v859
        %876 = vst [vmem:[%s231 + $0x48] sm:$0xff] %v860
        %877 = vst [vmem:[%s231 + $0x50] sm:$0xff] %v861
        %878 = vst [vmem:[%s231 + $0x58] sm:$0xff] %v862
        %879 = vst [vmem:[%s231 + $0x60] sm:$0xff] %v863
        %880 = vst [vmem:[%s231 + $0x68] sm:$0xff] %v864
        %881 = vst [vmem:[%s231 + $0x70] sm:$0xff] %v865
        %882 = vst [vmem:[%s231 + $0x78] sm:$0xff] %v866
        %s883 = sand.u32 %s151, 1
        %s884 = scalar_lea.sflag [#allocation3], %s883
        %s885 = sand.u32 %s151, 1
        %s886 = smul.addr %s885, 128
        %s887 = scalar_lea.vmem [#allocation2], %s886
        // Predicated region
        $region41: #{tpu_custom_call.1} parent=39 // pred_check
          %p888 = pneg %p161
        $region42: #{tpu_custom_call.1} parent=39 // pred_check_branch
          %890 = sbr.rel (%p888) target = $region44
        $region43: #{tpu_custom_call.1} parent=39 // pred_region
          %s891 = smul.u32 16, %s24
          %893 = vsyncadd %s884, 0
          %s894 = smul.addr %s23, 32
          %s895 = sadd.s32 %s891, %s894
          %s896 = smul.addr %s895, 8
          %s897 = scalar_lea.hbm %s5, %s896
          %s898 = sshll.u32 %s887, 4
          %s899 = int_to_ptr.vmem [resolvable:$true] %s898
          %s900 = sshll.u32 %s897, 4
          %s901 = int_to_ptr.hbm [resolvable:$true] %s900
          %906 = dma.vmem_to_hbm [thread:$0]  %s899, 2048, %s901, %s884, 128, 128, 8
        $region44: #{tpu_custom_call.1} parent=39 // pred_fallthru
          _
      $region40: #{tpu_custom_call.1} parent=5 // pred_fallthru
        _
      %p907 = scmp.le.s32.totalorder 2, %s14
      // Predicated region
      $region45: #{tpu_custom_call.1} parent=5 // pred_check
        %p908 = pneg %p907
      $region46: #{tpu_custom_call.1} parent=5 // pred_check_branch
        %910 = sbr.rel (%p908) target = $region48
      $region47: #{tpu_custom_call.1} parent=5 // pred_region
        %s911 = ssub.s32 %s14, 2
        // Predicated region
        $region49: #{tpu_custom_call.1} parent=47 // pred_check
          %p912 = pneg %p167
        $region50: #{tpu_custom_call.1} parent=47 // pred_check_branch
          %914 = sbr.rel (%p912) target = $region52
        $region51: #{tpu_custom_call.1} parent=47 // pred_region
          %s915 = sand.u32 %s152, 1
          %s916 = scalar_lea.sflag [#allocation3], %s915
          %s917 = sand.u32 %s152, 1
          %s918 = smul.addr %s917, 128
          %s919 = scalar_lea.vmem [#allocation2], %s918
          %921 = dma.done %s916, 2048
        $region52: #{tpu_custom_call.1} parent=47 // pred_fallthru
          _
      $region48: #{tpu_custom_call.1} parent=5 // pred_fallthru
        _
    $region6: #{tpu_custom_call.1} parent=1 // loop_footer
      %s18 = sadd.s32 1, %s14
    $region7: #{tpu_custom_call.1} parent=1 // loop_footer_branch
      %13 = sbr.rel target = $region3
    $region8: #{tpu_custom_call.1} parent=1 // loop_exit
      _
    %922 = vsyncpa [#allocation3], 1
    %s923 = scalar_lea.sflag [#allocation3], 1
    %924 = vsyncpa %s923, 1

</llo_original>
